<compile_context>
chip_gen: v6e
topology: v6e:2x2x1
jax: 0.10.0
libtpu: 0.0.40
codegen_flags: <defaults>
</compile_context>

<pallas_src>
import functools

import jax
import jax.numpy as jnp
from jax.experimental import pallas as pl
from jax.experimental.pallas import tpu as pltpu


def _round_up(x, m):
    return (x + m - 1) // m * m


def _aligned_divisor(dim, target, align):
    """Largest t <= target with t % align == 0 and dim % t == 0, else None."""
    hi = (min(target, dim) // align) * align
    for t in range(hi, 0, -align):
        if dim % t == 0:
            return t
    return None


def _vmem_capacity_bytes():
    """Physical VMEM per core (generation-aware); conservative v7x fallback."""
    try:
        info = pltpu.get_tpu_info()
        cap = getattr(info, "vmem_capacity_bytes", None)
        if cap:
            return int(cap)
    except Exception:
        pass
    return 64 * 1024 * 1024


def _lora_kernel(x_ref, a_ref, b_ref, o_ref, xa_ref, *, alpha):
    k = pl.program_id(1)

    @pl.when(k == 0)
    def _():
        xa_ref[...] = jnp.zeros_like(xa_ref)

    # (tm, tk) @ (tk, rank) -> f32 accumulate on the MXU.
    xa_ref[...] += jnp.dot(x_ref[...], a_ref[...],
                           preferred_element_type=jnp.float32)

    @pl.when(k == pl.num_programs(1) - 1)
    def _():
        # Fold alpha into the tiny (tm, rank) intermediate (rank << out_dim),
        # cast to B's dtype (native bf16 MXU path when weights are bf16), and
        # accumulate the second dot in f32.
        xa = (alpha * xa_ref[...]).astype(b_ref.dtype)
        out = jnp.dot(xa, b_ref[...], preferred_element_type=jnp.float32)
        o_ref[...] = out.astype(o_ref.dtype)


def lora_forward(x, A, B, alpha):
    """alpha * (x @ A @ B); M tiled "parallel", K streamed "arbitrary"."""
    M, K = x.shape
    K_a, rank = A.shape
    rank_b, N = B.shape
    assert K_a == K and rank_b == rank

    # Cast the small A operand to the activation dtype so the first (large)
    # dot never implicitly promotes the (tm, tk) x tile.
    A = A.astype(x.dtype)
    out_dtype = x.dtype

    x_isz = jnp.dtype(x.dtype).itemsize
    a_isz = jnp.dtype(A.dtype).itemsize
    b_isz = jnp.dtype(B.dtype).itemsize
    o_isz = jnp.dtype(out_dtype).itemsize

    # Generation-aware VMEM: ~80% of physical (v7x 64MiB -> ~51MiB,
    # v5e/v6e 128MiB -> ~102MiB), with headroom for internal scratch.
    vmem_cap = _vmem_capacity_bytes()
    vmem_limit = max(32 * 1024 * 1024,
                     min(int(vmem_cap * 0.8), vmem_cap - 8 * 1024 * 1024))
    budget = vmem_limit - 2 * 1024 * 1024

    def footprint(tm, tk):
        return (2 * tm * tk * x_isz        # x strip, double-buffered
                + 2 * tk * rank * a_isz    # A strip, double-buffered
                + 2 * rank * N * b_isz     # B: constant index, 2 bufs allocated
                + 2 * tm * N * o_isz       # output tile, double-buffered
                + tm * rank * 4)           # f32 accumulator scratch

    # ---- K (reduction) tiling: never pad x when avoidable. Use the full K
    # when small, otherwise an exact 128-aligned divisor of K.
    pad_k = 0
    tk_cands = []
    for tgt in (8192, 4096, 2048, 1024, 512):
        d = K if K <= tgt else _aligned_divisor(K, tgt, 128)
        if d is not None and d not in tk_cands:
            tk_cands.append(d)
    if not tk_cands:
        # Rare: huge K that is not a multiple of 128 -> pad K (last resort).
        pad_k = _round_up(K, 128) - K
        for tgt in (4096, 2048, 1024, 512, 128):
            d = _aligned_divisor(K + pad_k, tgt, 128)
            if d is not None and d not in tk_cands:
                tk_cands.append(d)

    # ---- M (batch) tiling: full M when small, else a multiple-of-8 divisor.
    pad_m = 0
    tm_cands = []
    for tgt in (1024, 512, 256, 128, 64, 32, 16, 8):
        d = M if M <= tgt else _aligned_divisor(M, tgt, 8)
        if d is not None and d not in tm_cands:
            tm_cands.append(d)
    if not tm_cands:
        # Rare: large M with no multiple-of-8 divisor -> pad a few rows.
        pad_m = _round_up(M, 8) - M
        for tgt in (1024, 512, 256, 128, 64, 32, 16, 8):
            d = _aligned_divisor(M + pad_m, tgt, 8)
            if d is not None and d not in tm_cands:
                tm_cands.append(d)

    Mp, Kp = M + pad_m, K + pad_k

    # Prefer the largest tm; within a tm, the largest tk that fits the budget
    # (i.e. shrink the K strip before dropping the batch tile size).
    tm = tk = None
    for tm_c in tm_cands:
        for tk_c in tk_cands:
            if footprint(tm_c, tk_c) <= budget:
                tm, tk = tm_c, tk_c
                break
        if tm is not None:
            break
    if tm is None:
        # Extreme output_dim: smallest candidates; raised vmem_limit absorbs it.
        tm, tk = tm_cands[-1], tk_cands[-1]

    # Feed both TensorCores on v7x: avoid a single M tile for sizeable batches
    # (harmless on single-TC v5e/v6e).
    if Mp // tm == 1 and Mp >= 256:
        d = _aligned_divisor(Mp, max(8, Mp // 2), 8)
        if d is not None:
            tm = d

    # Pad only on the rare fallback paths (zero rows/cols contribute nothing).
    if pad_m or pad_k:
        x = jnp.pad(x, ((0, pad_m), (0, pad_k)))
    if pad_k:
        A = jnp.pad(A, ((0, pad_k), (0, 0)))

    # NOTE: alpha must be a static Python scalar here; route it through an
    # SMEM scalar instead if a traced alpha is ever required.
    kernel = functools.partial(_lora_kernel, alpha=float(alpha))

    out = pl.pallas_call(
        kernel,
        out_shape=jax.ShapeDtypeStruct((Mp, N), out_dtype),
        grid_spec=pltpu.PrefetchScalarGridSpec(
            num_scalar_prefetch=0,
            grid=(Mp // tm, Kp // tk),
            in_specs=[
                pl.BlockSpec((tm, tk), lambda i, k: (i, k)),    # x strip
                pl.BlockSpec((tk, rank), lambda i, k: (k, 0)),  # A strip
                pl.BlockSpec((rank, N), lambda i, k: (0, 0)),   # B (resident)
            ],
            out_specs=pl.BlockSpec((tm, N), lambda i, k: (i, 0)),
            scratch_shapes=[pltpu.VMEM((tm, rank), jnp.float32)],
        ),
        compiler_params=pltpu.CompilerParams(
            dimension_semantics=("parallel", "arbitrary"),
            vmem_limit_bytes=vmem_limit,
        ),
    )(x, A, B)

    # No post-kernel HBM copy in the common (unpadded) case.
    return out if pad_m == 0 else out[:M]


if __name__ == "__main__":
    # Small shapes consistent with the module's forward: x: [batch, input_dim].
    # Awkward sizes (batch=10, output_dim=48) exercise the "full-dim block,
    # no padding, no post-slice" paths of the wrapper.
    batch, input_dim, rank, output_dim = 10, 64, 8, 48
    alpha = 2.0

    key = jax.random.PRNGKey(0)
    kx, ka, kb = jax.random.split(key, 3)

    x = jax.random.normal(kx, (batch, input_dim), dtype=jnp.float32)

    # Deterministic parameter init mirroring LoRALayer.__init__:
    #   A ~ randn(input_dim, rank) / sqrt(rank),  B = zeros(rank, output_dim)
    std_dev = 1.0 / jnp.sqrt(jnp.float32(rank))
    A_init = jax.random.normal(ka, (input_dim, rank), dtype=jnp.float32) * std_dev
    B_init = jnp.zeros((rank, output_dim), dtype=jnp.float32)

    # 1) Module-init case (B == 0 -> y == 0).
    y0 = jax.block_until_ready(lora_forward(x, A_init, B_init, alpha))
    assert y0.shape == (batch, output_dim)
    assert jnp.allclose(y0, alpha * (x @ A_init @ B_init), atol=1e-5, rtol=1e-5)

    # 2) Non-zero B so the check catches a wrong contraction / missing alpha.
    B_rand = jax.random.normal(kb, (rank, output_dim), dtype=jnp.float32)
    y1 = jax.block_until_ready(lora_forward(x, A_init, B_rand, alpha))
    y1_ref = alpha * (x @ A_init @ B_rand)
    assert y1.shape == (batch, output_dim)
    assert jnp.allclose(y1, y1_ref, atol=1e-4, rtol=1e-4)

    print("KERNEL_OK")
</pallas_src>

<mosaic_0001>
module attributes {stable_mosaic.version = 11 : i64} {
  func.func @_lora_kernel(%arg0: i32, %arg1: i32, %arg2: memref<10x64xf32, #tpu.memory_space<vmem>>, %arg3: memref<64x8xf32, #tpu.memory_space<vmem>>, %arg4: memref<8x48xf32, #tpu.memory_space<vmem>>, %arg5: memref<10x48xf32, #tpu.memory_space<vmem>>, %arg6: memref<10x8xf32, #tpu.memory_space<vmem>>) attributes {dimension_semantics = [#tpu.dimension_semantics<parallel>, #tpu.dimension_semantics<arbitrary>], iteration_bounds = array<i64: 1, 1>, scalar_prefetch = 0 : i64, scratch_operands = 1 : i64, tpu.core_type = #tpu.core_type<tc>, window_params = [{transform_indices = @transform_0, window_bounds = array<i64: 10, 64>}, {transform_indices = @transform_1, window_bounds = array<i64: 64, 8>}, {pipeline_mode = #tpu.pipeline_mode<synchronous>, transform_indices = @transform_2, window_bounds = array<i64: 8, 48>}, {transform_indices = @transform_3, window_bounds = array<i64: 10, 48>}]} {
    %c0_i32 = arith.constant 0 : i32
    %0 = arith.cmpi eq, %arg1, %c0_i32 : i32
    %1 = arith.extui %0 : i1 to i32
    %c0_i32_0 = arith.constant 0 : i32
    %2 = arith.cmpi ne, %1, %c0_i32_0 : i32
    scf.if %2 {
      %cst_10 = arith.constant 0.000000e+00 : f32
      %12 = vector.broadcast %cst_10 : f32 to vector<10x8xf32>
      %c0_11 = arith.constant 0 : index
      %c0_12 = arith.constant 0 : index
      %13 = vector.load %arg6[%c0_11, %c0_12] : memref<10x8xf32, #tpu.memory_space<vmem>>, vector<10x8xf32>
      tpu.vector_store %arg6[%c0_11, %c0_12], %12 {strides = array<i32>} : memref<10x8xf32, #tpu.memory_space<vmem>>, vector<10x8xf32>,
    } else {
    }
    %c0 = arith.constant 0 : index
    %c0_1 = arith.constant 0 : index
    %3 = vector.load %arg6[%c0, %c0_1] : memref<10x8xf32, #tpu.memory_space<vmem>>, vector<10x8xf32>
    %c0_2 = arith.constant 0 : index
    %c0_3 = arith.constant 0 : index
    %4 = vector.load %arg2[%c0_2, %c0_3] : memref<10x64xf32, #tpu.memory_space<vmem>>, vector<10x64xf32>
    %c0_4 = arith.constant 0 : index
    %c0_5 = arith.constant 0 : index
    %5 = vector.load %arg3[%c0_4, %c0_5] : memref<64x8xf32, #tpu.memory_space<vmem>>, vector<64x8xf32>
    %cst = arith.constant dense<0.000000e+00> : vector<10x8xf32>
    %6 = tpu.matmul %4, %5, %cst {dimension_numbers = #tpu.dot_dimension_numbers<[1], [0], [0], [1], [0, 0, 1, 1], [], []>} : vector<10x64xf32>, vector<64x8xf32>, vector<10x8xf32> -> vector<10x8xf32>
    %7 = arith.addf %3, %6 : vector<10x8xf32>
    %c0_6 = arith.constant 0 : index
    %c0_7 = arith.constant 0 : index
    %8 = vector.load %arg6[%c0_6, %c0_7] : memref<10x8xf32, #tpu.memory_space<vmem>>, vector<10x8xf32>
    tpu.vector_store %arg6[%c0_6, %c0_7], %7 {strides = array<i32>} : memref<10x8xf32, #tpu.memory_space<vmem>>, vector<10x8xf32>,
    %c0_i32_8 = arith.constant 0 : i32
    %9 = arith.cmpi eq, %arg1, %c0_i32_8 : i32
    %10 = arith.extui %9 : i1 to i32
    %c0_i32_9 = arith.constant 0 : i32
    %11 = arith.cmpi ne, %10, %c0_i32_9 : i32
    scf.if %11 {
      %c0_10 = arith.constant 0 : index
      %c0_11 = arith.constant 0 : index
      %12 = vector.load %arg6[%c0_10, %c0_11] : memref<10x8xf32, #tpu.memory_space<vmem>>, vector<10x8xf32>
      %cst_12 = arith.constant 2.000000e+00 : f32
      %13 = vector.broadcast %cst_12 : f32 to vector<10x8xf32>
      %14 = arith.mulf %13, %12 : vector<10x8xf32>
      %c0_13 = arith.constant 0 : index
      %c0_14 = arith.constant 0 : index
      %15 = vector.load %arg4[%c0_13, %c0_14] : memref<8x48xf32, #tpu.memory_space<vmem>>, vector<8x48xf32>
      %cst_15 = arith.constant dense<0.000000e+00> : vector<10x48xf32>
      %16 = tpu.matmul %14, %15, %cst_15 {dimension_numbers = #tpu.dot_dimension_numbers<[1], [0], [0], [1], [0, 0, 1, 1], [], []>} : vector<10x8xf32>, vector<8x48xf32>, vector<10x48xf32> -> vector<10x48xf32>
      %c0_16 = arith.constant 0 : index
      %c0_17 = arith.constant 0 : index
      %17 = vector.load %arg5[%c0_16, %c0_17] : memref<10x48xf32, #tpu.memory_space<vmem>>, vector<10x48xf32>
      tpu.vector_store %arg5[%c0_16, %c0_17], %16 {strides = array<i32>} : memref<10x48xf32, #tpu.memory_space<vmem>>, vector<10x48xf32>,
    } else {
    }
    return
  }
  func.func @transform_0(%arg0: i32, %arg1: i32) -> (i32, i32) {
    %c0_i32 = arith.constant 0 : i32
    return %arg0, %arg1 : i32, i32
  }
  func.func @transform_1(%arg0: i32, %arg1: i32) -> (i32, i32) {
    %c0_i32 = arith.constant 0 : i32
    %c0_i32_0 = arith.constant 0 : i32
    return %arg1, %c0_i32 : i32, i32
  }
  func.func @transform_2(%arg0: i32, %arg1: i32) -> (i32, i32) {
    %c0_i32 = arith.constant 0 : i32
    %c0_i32_0 = arith.constant 0 : i32
    %c0_i32_1 = arith.constant 0 : i32
    return %c0_i32, %c0_i32_0 : i32, i32
  }
  func.func @transform_3(%arg0: i32, %arg1: i32) -> (i32, i32) {
    %c0_i32 = arith.constant 0 : i32
    %c0_i32_0 = arith.constant 0 : i32
    return %arg0, %c0_i32 : i32, i32
  }
}

</mosaic_0001>

<llo_original>
// kernel: tpu_custom_call.1
$region0: #{tpu_custom_call.1}
  #allocation0 [shape = 'u32[]', space=smem, size = 0x4, offset = 0x4, fixed_abs, tag = 'smem constant byte address 0x4 - core index']
  #allocation1 [shape = 'u32[144,128]{1,0:T(1,128)}', space=vmem, size = 0x12000, scoped, tag = 'internal scratch']
  #allocation2 [shape = 'f32[10,8]{1,0:T(8,128)}', space=vmem, size = 0x2000, scoped, tag = 'scratch operand']
  %s0 = inlined_call_operand.vmem [shape: f32[10,64], index: 0, kind: input, shape index: {}]
  %s1 = inlined_call_operand.vmem [shape: f32[64,8], index: 1, kind: input, shape index: {}]
  %s2 = inlined_call_operand.vmem [shape: f32[8,48], index: 2, kind: input, shape index: {}]
  %s3 = inlined_call_operand.hbm [shape: f32[10,48], index: 3, kind: output, shape index: {}]
  %s4 = sld [smem:[#allocation0]]
  $region30: #{tpu_custom_call.1} parent=0
    _
  %s6 = ssub.s32 1, %s4
  %s7 = scalar_select 0, %s6, %s4
  $region1: #{tpu_custom_call.1} parent=0
    #allocation3 [shape = 'u8[8192]{0}', space=vmem, size = 0x2000, scoped, tag = 'output window, operand 0, single buffered']
    #allocation4 [shape = 's32[1]{0}', space=sflag, size = 0x4, scoped, tag = 'scoped memory for tpu_custom_call.1']
    %8 = vsyncpa [#allocation4], 0
    // Predicated region
    $region2: #{tpu_custom_call.1} parent=1 // pred_check
      _
    $region3: #{tpu_custom_call.1} parent=1 // pred_check_branch
      %10 = sbr.rel (0) target = $region5
    $region4: #{tpu_custom_call.1} parent=1 // pred_region
      _
    $region5: #{tpu_custom_call.1} parent=1 // pred_fallthru
      _
    // Predicated region
    $region6: #{tpu_custom_call.1} parent=1 // pred_check
      _
    $region7: #{tpu_custom_call.1} parent=1 // pred_check_branch
      %12 = sbr.rel (0) target = $region9
    $region8: #{tpu_custom_call.1} parent=1 // pred_region
      _
    $region9: #{tpu_custom_call.1} parent=1 // pred_fallthru
      _
    // Predicated region
    $region10: #{tpu_custom_call.1} parent=1 // pred_check
      _
    $region11: #{tpu_custom_call.1} parent=1 // pred_check_branch
      %14 = sbr.rel (0) target = $region13
    $region12: #{tpu_custom_call.1} parent=1 // pred_region
      _
    $region13: #{tpu_custom_call.1} parent=1 // pred_fallthru
      _
    %p15 = scmp.eq.s32.totalorder 0, 0
    // Predicated region
    $region14: #{tpu_custom_call.1} parent=1 // pred_check
      %p16 = pneg %p15
    $region15: #{tpu_custom_call.1} parent=1 // pred_check_branch
      %18 = sbr.rel (%p16) target = $region17
    $region16: #{tpu_custom_call.1} parent=1 // pred_region
      %vm19 = vcmask 64512
      %20 = vst.msk [vmem:[#allocation2] sm:$0xff] %vm19, 0.0
      %vm21 = vcmask 58368
      %22 = vst.msk [vmem:[#allocation2 + $0x8] sm:$0x3] %vm21, 0.0
    $region17: #{tpu_custom_call.1} parent=1 // pred_fallthru
      _
    %v23 = vld [vmem:[#allocation2] sm:$0xff]
    %v24 = vld [vmem:[#allocation2 + $0x8] sm:$0x3]
    %v25 = vld [vmem:[%s0] sm:$0xff]
    %v26 = vld [vmem:[%s0 + $0x8] sm:$0x3]
    %v27 = vld [vmem:[%s1] sm:$0xff]
    %v28 = vld [vmem:[%s1 + $0x8] sm:$0xff]
    %v29 = vld [vmem:[%s1 + $0x10] sm:$0xff]
    %v30 = vld [vmem:[%s1 + $0x18] sm:$0xff]
    %v31 = vld [vmem:[%s1 + $0x20] sm:$0xff]
    %v32 = vld [vmem:[%s1 + $0x28] sm:$0xff]
    %v33 = vld [vmem:[%s1 + $0x30] sm:$0xff]
    %v34 = vld [vmem:[%s1 + $0x38] sm:$0xff]
    %vm35 = vcmask 523264
    %v37 = vsel %vm35, %v25, 0
    %v40 = vsel %vm35, %v26, 0
    %42 = vmatprep.subr.mxu0 0.0
    %43 = vmatpush1.msra.mxu0 0.0
    %44 = vmatprep.subr.mxu0 0.0
    %45 = vmatpush1.msra.mxu0 0.0
    %46 = vmatprep.subr.mxu0 0.0
    %47 = vmatpush1.msra.mxu0 0.0
    %48 = vmatprep.subr.mxu0 0.0
    %49 = vmatpush1.msra.mxu0 0.0
    %50 = vmatprep.subr.mxu0 0.0
    %51 = vmatpush1.msra.mxu0 0.0
    %52 = vmatprep.subr.mxu0 0.0
    %53 = vmatpush1.msra.mxu0 0.0
    %54 = vmatprep.subr.mxu0 0.0
    %55 = vmatpush1.msra.mxu0 0.0
    %56 = vmatprep.subr.mxu0 0.0
    %57 = vmatpush1.msra.mxu0 0.0
    %58 = vmatprep.subr.mxu0 0.0
    %59 = vmatpush1.msra.mxu0 %v34
    %60 = vmatprep.subr.mxu0 0.0
    %61 = vmatpush1.msra.mxu0 %v33
    %62 = vmatprep.subr.mxu0 0.0
    %63 = vmatpush1.msra.mxu0 %v32
    %64 = vmatprep.subr.mxu0 0.0
    %65 = vmatpush1.msra.mxu0 %v31
    %66 = vmatprep.subr.mxu0 0.0
    %67 = vmatpush1.msra.mxu0 %v30
    %68 = vmatprep.subr.mxu0 0.0
    %69 = vmatpush1.msra.mxu0 %v29
    %70 = vmatprep.subr.mxu0 0.0
    %71 = vmatpush1.msra.mxu0 %v28
    %72 = vmatprep.subr.mxu0 0.0
    %73 = vmatpush1.msra.mxu0 %v27
    %74 = vmatprep.subr.mxu0 0.0
    %75 = vmatpush2.msra.mxu0 0.0
    %76 = vmatprep.subr.mxu0 0.0
    %77 = vmatpush2.msra.mxu0 0.0
    %78 = vmatprep.subr.mxu0 0.0
    %79 = vmatpush2.msra.mxu0 0.0
    %80 = vmatprep.subr.mxu0 0.0
    %81 = vmatpush2.msra.mxu0 0.0
    %82 = vmatprep.subr.mxu0 0.0
    %83 = vmatpush2.msra.mxu0 0.0
    %84 = vmatprep.subr.mxu0 0.0
    %85 = vmatpush2.msra.mxu0 0.0
    %86 = vmatprep.subr.mxu0 0.0
    %87 = vmatpush2.msra.mxu0 0.0
    %88 = vmatprep.subr.mxu0 0.0
    %89 = vmatpush2.msra.mxu0 0.0
    %90 = vmatprep.subr.mxu0 0.0
    %91 = vmatpush2.msra.mxu0 0.0
    %92 = vmatprep.subr.mxu0 0.0
    %93 = vmatpush2.msra.mxu0 0.0
    %94 = vmatprep.subr.mxu0 0.0
    %95 = vmatpush2.msra.mxu0 0.0
    %96 = vmatprep.subr.mxu0 0.0
    %97 = vmatpush2.msra.mxu0 0.0
    %98 = vmatprep.subr.mxu0 0.0
    %99 = vmatpush2.msra.mxu0 0.0
    %100 = vmatprep.subr.mxu0 0.0
    %101 = vmatpush2.msra.mxu0 0.0
    %102 = vmatprep.subr.mxu0 0.0
    %103 = vmatpush2.msra.mxu0 0.0
    %104 = vmatprep.subr.mxu0 0.0
    %105 = vmatpush2.msra.mxu0 0.0
    %106 = vmatprep.mubr.f32.mxu0 0.0
    %107 = vmatmul.mubr.f32.gmra.mxu0 %v37
    %v108 = vpop.f32.mrf.mxu0
    %v109 = vadd.f32 0.0, %v108
    %v110 = vpop.f32.mrf.mxu0
    %111 = vmatprep.mubr.f32.mxu0 0.0
    %112 = vmatmul.mubr.f32.gmra.mxu0 %v40
    %v113 = vpop.f32.mrf.mxu0
    %v114 = vadd.f32 0.0, %v113
    %v115 = vpop.f32.mrf.mxu0
    %116 = vdwg.mxu0
    %v117 = vadd.f32 %v23, %v109
    %v118 = vadd.f32 %v24, %v114
    %vm119 = vcmask 64512
    %120 = vst.msk [vmem:[#allocation2] sm:$0xff] %vm119, %v117
    %vm121 = vcmask 58368
    %122 = vst.msk [vmem:[#allocation2 + $0x8] sm:$0x3] %vm121, %v118
    // Predicated region
    $region18: #{tpu_custom_call.1} parent=1 // pred_check
      %p123 = pneg %p15
    $region19: #{tpu_custom_call.1} parent=1 // pred_check_branch
      %125 = sbr.rel (%p123) target = $region21
    $region20: #{tpu_custom_call.1} parent=1 // pred_region
      %v126 = vld [vmem:[#allocation2] sm:$0xff]
      %v127 = vld [vmem:[#allocation2 + $0x8] sm:$0x3]
      %v128 = vmul.f32 %v126, 2.0
      %v129 = vmul.f32 %v127, 2.0
      %v130 = vld [vmem:[%s2] sm:$0xff]
      %v132 = vsel %vm119, %v128, 0
      %v135 = vsel %vm119, %v129, 0
      %137 = vmatprep.subr.mxu0 0.0
      %138 = vmatpush1.msra.mxu0 0.0
      %139 = vmatprep.subr.mxu0 0.0
      %140 = vmatpush1.msra.mxu0 0.0
      %141 = vmatprep.subr.mxu0 0.0
      %142 = vmatpush1.msra.mxu0 0.0
      %143 = vmatprep.subr.mxu0 0.0
      %144 = vmatpush1.msra.mxu0 0.0
      %145 = vmatprep.subr.mxu0 0.0
      %146 = vmatpush1.msra.mxu0 0.0
      %147 = vmatprep.subr.mxu0 0.0
      %148 = vmatpush1.msra.mxu0 0.0
      %149 = vmatprep.subr.mxu0 0.0
      %150 = vmatpush1.msra.mxu0 0.0
      %151 = vmatprep.subr.mxu0 0.0
      %152 = vmatpush1.msra.mxu0 0.0
      %153 = vmatprep.subr.mxu0 0.0
      %154 = vmatpush1.msra.mxu0 0.0
      %155 = vmatprep.subr.mxu0 0.0
      %156 = vmatpush1.msra.mxu0 0.0
      %157 = vmatprep.subr.mxu0 0.0
      %158 = vmatpush1.msra.mxu0 0.0
      %159 = vmatprep.subr.mxu0 0.0
      %160 = vmatpush1.msra.mxu0 0.0
      %161 = vmatprep.subr.mxu0 0.0
      %162 = vmatpush1.msra.mxu0 0.0
      %163 = vmatprep.subr.mxu0 0.0
      %164 = vmatpush1.msra.mxu0 0.0
      %165 = vmatprep.subr.mxu0 0.0
      %166 = vmatpush1.msra.mxu0 0.0
      %167 = vmatprep.subr.mxu0 0.0
      %168 = vmatpush1.msra.mxu0 %v130
      %169 = vmatprep.subr.mxu0 0.0
      %170 = vmatpush2.msra.mxu0 0.0
      %171 = vmatprep.subr.mxu0 0.0
      %172 = vmatpush2.msra.mxu0 0.0
      %173 = vmatprep.subr.mxu0 0.0
      %174 = vmatpush2.msra.mxu0 0.0
      %175 = vmatprep.subr.mxu0 0.0
      %176 = vmatpush2.msra.mxu0 0.0
      %177 = vmatprep.subr.mxu0 0.0
      %178 = vmatpush2.msra.mxu0 0.0
      %179 = vmatprep.subr.mxu0 0.0
      %180 = vmatpush2.msra.mxu0 0.0
      %181 = vmatprep.subr.mxu0 0.0
      %182 = vmatpush2.msra.mxu0 0.0
      %183 = vmatprep.subr.mxu0 0.0
      %184 = vmatpush2.msra.mxu0 0.0
      %185 = vmatprep.subr.mxu0 0.0
      %186 = vmatpush2.msra.mxu0 0.0
      %187 = vmatprep.subr.mxu0 0.0
      %188 = vmatpush2.msra.mxu0 0.0
      %189 = vmatprep.subr.mxu0 0.0
      %190 = vmatpush2.msra.mxu0 0.0
      %191 = vmatprep.subr.mxu0 0.0
      %192 = vmatpush2.msra.mxu0 0.0
      %193 = vmatprep.subr.mxu0 0.0
      %194 = vmatpush2.msra.mxu0 0.0
      %195 = vmatprep.subr.mxu0 0.0
      %196 = vmatpush2.msra.mxu0 0.0
      %197 = vmatprep.subr.mxu0 0.0
      %198 = vmatpush2.msra.mxu0 0.0
      %199 = vmatprep.subr.mxu0 0.0
      %200 = vmatpush2.msra.mxu0 0.0
      %201 = vmatprep.mubr.f32.mxu0 0.0
      %202 = vmatmul.mubr.f32.gmra.mxu0 %v132
      %v203 = vpop.f32.mrf.mxu0
      %v204 = vadd.f32 0.0, %v203
      %v205 = vpop.f32.mrf.mxu0
      %206 = vmatprep.mubr.f32.mxu0 0.0
      %207 = vmatmul.mubr.f32.gmra.mxu0 %v135
      %v208 = vpop.f32.mrf.mxu0
      %v209 = vadd.f32 0.0, %v208
      %v210 = vpop.f32.mrf.mxu0
      %211 = vdwg.mxu0
      %vm212 = vcmask 392192
      %213 = vst.msk [vmem:[#allocation3] sm:$0xff] %vm212, %v204
      %vm214 = vcmask 386048
      %215 = vst.msk [vmem:[#allocation3 + $0x8] sm:$0x3] %vm214, %v209
    $region21: #{tpu_custom_call.1} parent=1 // pred_fallthru
      _
    // Predicated region
    $region22: #{tpu_custom_call.1} parent=1 // pred_check
      _
    $region23: #{tpu_custom_call.1} parent=1 // pred_check_branch
      %217 = sbr.rel (0) target = $region25
    $region24: #{tpu_custom_call.1} parent=1 // pred_region
      %s219 = ssub.s32 256, 256
      %220 = vsyncadd [#allocation4], %s219
      %s221 = sshll.u32 [#allocation3], 4
      %s222 = int_to_ptr.vmem [resolvable:$true] %s221
      %227 = dma.vmem_to_hbm [thread:$0]  %s222, 256, %s3, [#allocation4], 128, 128, 8
    $region25: #{tpu_custom_call.1} parent=1 // pred_fallthru
      _
    // Predicated region
    $region26: #{tpu_custom_call.1} parent=1 // pred_check
      _
    $region27: #{tpu_custom_call.1} parent=1 // pred_check_branch
      %229 = sbr.rel (0) target = $region29
    $region28: #{tpu_custom_call.1} parent=1 // pred_region
      %230 = dma.done [#allocation4], 256
    $region29: #{tpu_custom_call.1} parent=1 // pred_fallthru
      _
    %231 = vsyncpa [#allocation4], 1

</llo_original>
